<compile_context>
chip_gen: v7x
topology: tpu7x:2x2x1
jax: 0.10.0
libtpu: 0.0.40
codegen_flags: <defaults>
</compile_context>

<pallas_src>
import functools

import jax
import jax.numpy as jnp
from jax.experimental import pallas as pl
from jax.experimental.pallas import tpu as pltpu


def _round_up(x: int, m: int) -> int:
    return ((x + m - 1) // m) * m


# ---------------------------------------------------------------------------
# Chip-aware VMEM budgets.
# ---------------------------------------------------------------------------
@functools.lru_cache(maxsize=None)
def _vmem_budgets():
    """(tile_budget_bytes, vmem_limit_bytes) for the tiled path on this chip."""
    try:
        cap = int(pltpu.get_tpu_info().vmem_capacity_bytes)
    except Exception:  # pragma: no cover - fall back to the tightest chip (v7x)
        cap = 64 << 20
    if cap <= (64 << 20):
        # v7x-class: 64 MiB VMEM per TensorCore, 2 TCs per chip.
        return 24 << 20, 40 << 20
    # v5e / v6e: 128 MiB VMEM per TensorCore.
    return 48 << 20, 80 << 20


_MAX_TM = 512          # fewer batch tiles -> fewer full passes over the weights
_MAX_TN = 1024
_MAX_TK = 1024
_SMALL_MAX_STEP_BYTES = 12 << 20   # per-member footprint cap for the small path
_SMALL_VMEM_LIMIT = 32 << 20       # safe on v5e/v6e/v7x scoped VMEM


# ---------------------------------------------------------------------------
# Kernels.
# ---------------------------------------------------------------------------
def _small_kernel(x_ref, w_ref, b_ref, o_ref):
    # x_ref: (B, I), w_ref: (I, O), b_ref: (1, O), o_ref: (B, O) -- one member.
    acc = jnp.dot(x_ref[...], w_ref[...], preferred_element_type=jnp.float32)
    o_ref[...] = (acc + b_ref[...].astype(jnp.float32)).astype(o_ref.dtype)


def _tiled_kernel(x_ref, w_ref, b_ref, o_ref, acc_ref):
    # x_ref: (tm, tk), w_ref: (tk, tn), b_ref: (1, tn), o_ref: (tm, tn)
    k = pl.program_id(3)

    @pl.when(k == 0)
    def _init():
        # Seed the accumulator with the bias -> finalize is a pure cast+store.
        acc_ref[...] = jnp.broadcast_to(
            b_ref[...].astype(jnp.float32), acc_ref.shape
        )

    acc_ref[...] += jnp.dot(
        x_ref[...], w_ref[...], preferred_element_type=jnp.float32
    )

    @pl.when(k == pl.num_programs(3) - 1)
    def _finalize():
        o_ref[...] = acc_ref[...].astype(o_ref.dtype)


# ---------------------------------------------------------------------------
# Tile selection: largest divisors of the aligned dims (no extra padding),
# shrunk greedily until the double-buffered footprint fits the chip budget.
# ---------------------------------------------------------------------------
def _divisor_tiles(dim: int, unit: int, cap: int):
    """Descending list of t <= min(dim, cap), t % unit == 0, dim % t == 0."""
    out = []
    t = unit
    hi = min(dim, cap)
    while t <= hi:
        if dim % t == 0:
            out.append(t)
        t += unit
    if not out:
        out = [min(dim, unit)]
    return sorted(out, reverse=True)


def _step_footprint(tm, tn, tk, cbytes, obytes):
    # Double-buffered inputs/outputs + f32 accumulator.
    return (
        2 * (tm * tk * cbytes + tk * tn * cbytes + tn * 4 + tm * tn * obytes)
        + tm * tn * 4
    )


def _pick_tiles(Bp, Ip, Op, sub, cbytes, obytes, budget):
    tm_c = _divisor_tiles(Bp, sub, _MAX_TM)
    tn_c = _divisor_tiles(Op, 128, _MAX_TN)
    tk_c = _divisor_tiles(Ip, 128, _MAX_TK)
    im = i_n = ik = 0
    prio = {"k": 2, "n": 1, "m": 0}  # on ties shrink K first (cheapest), M last
    while _step_footprint(tm_c[im], tn_c[i_n], tk_c[ik], cbytes, obytes) > budget:
        cands = []
        if ik + 1 < len(tk_c):
            cands.append((tk_c[ik], prio["k"], "k"))
        if i_n + 1 < len(tn_c):
            cands.append((tn_c[i_n], prio["n"], "n"))
        if im + 1 < len(tm_c):
            cands.append((tm_c[im], prio["m"], "m"))
        if not cands:
            break
        _, _, which = max(cands)
        if which == "k":
            ik += 1
        elif which == "n":
            i_n += 1
        else:
            im += 1
    return tm_c[im], tn_c[i_n], tk_c[ik]


# ---------------------------------------------------------------------------
# Public wrapper.
# ---------------------------------------------------------------------------
def ensemble_linear(x, lin_w, lin_b, *, force_tiled=None, compute_dtype=None):
    """Pallas implementation of EnsembleLinear.forward.

    x: (E, B, I), lin_w: (E, I, O), lin_b: (E, O)  ->  (E, B, O)

    force_tiled : test knob (True -> tiled path, False -> per-member path).
    compute_dtype : optional narrow dtype (e.g. jnp.bfloat16) for x / lin_w;
        accumulation stays float32, bias stays in its original dtype, the
        output dtype stays x.dtype.
    """
    E, B, I = x.shape
    Ew, Iw, O = lin_w.shape
    assert (Ew, Iw) == (E, I)
    assert lin_b.shape == (E, O)

    out_dtype = x.dtype
    cdtype = jnp.dtype(compute_dtype) if compute_dtype is not None else jnp.dtype(x.dtype)
    cbytes = cdtype.itemsize
    obytes = jnp.dtype(out_dtype).itemsize
    sub = {4: 8, 2: 16, 1: 32}.get(cbytes, 8)  # native sublane tile per dtype

    x_c = x.astype(cdtype) if cdtype != x.dtype else x
    w_c = lin_w.astype(cdtype) if cdtype != lin_w.dtype else lin_w

    # Lane/sublane-aligned dims (only the tiled path ever materializes a pad).
    B8 = _round_up(B, sub)
    I128 = _round_up(I, 128)
    O128 = _round_up(O, 128)

    small_step_bytes = 2 * (
        B8 * I128 * cbytes + I128 * O128 * cbytes + O128 * 4 + B8 * O128 * obytes
    )
    use_small = small_step_bytes <= _SMALL_MAX_STEP_BYTES
    if force_tiled is True:
        use_small = False
    elif force_tiled is False:
        if small_step_bytes > (_SMALL_VMEM_LIMIT - (4 << 20)):
            raise ValueError(
                "force_tiled=False: per-member footprint "
                f"{small_step_bytes} B exceeds the small-path VMEM budget"
            )
        use_small = True

    # ---------------- per-member (small) path: no padding at all -----------
    if use_small:
        b_r = lin_b.reshape(E, 1, O)
        return pl.pallas_call(
            _small_kernel,
            out_shape=jax.ShapeDtypeStruct((E, B, O), out_dtype),
            grid_spec=pltpu.PrefetchScalarGridSpec(
                num_scalar_prefetch=0,
                grid=(E,),
                in_specs=[
                    pl.BlockSpec((None, B, I), lambda e: (e, 0, 0)),
                    pl.BlockSpec((None, I, O), lambda e: (e, 0, 0)),
                    pl.BlockSpec((None, 1, O), lambda e: (e, 0, 0)),
                ],
                out_specs=pl.BlockSpec((None, B, O), lambda e: (e, 0, 0)),
            ),
            compiler_params=pltpu.CompilerParams(
                dimension_semantics=("parallel",),
                vmem_limit_bytes=_SMALL_VMEM_LIMIT,
            ),
        )(x_c, w_c, b_r)

    # ---------------- tiled path --------------------------------------------
    tile_budget, vmem_limit = _vmem_budgets()
    Bp, Ip, Op = B8, I128, O128
    tm, tn, tk = _pick_tiles(Bp, Ip, Op, sub, cbytes, obytes, tile_budget)

    x_p = x_c
    if (Bp, Ip) != (B, I):
        x_p = jnp.pad(x_c, ((0, 0), (0, Bp - B), (0, Ip - I)))
    w_p = w_c
    if (Ip, Op) != (I, O):
        w_p = jnp.pad(w_c, ((0, 0), (0, Ip - I), (0, Op - O)))
    b_p = lin_b
    if Op != O:
        b_p = jnp.pad(lin_b, ((0, 0), (0, Op - O)))
    b_p = b_p.reshape(E, 1, Op)  # keep the lane dim last and dense

    grid = (E, Bp // tm, Op // tn, Ip // tk)
    grid_spec = pltpu.PrefetchScalarGridSpec(
        num_scalar_prefetch=0,
        grid=grid,
        in_specs=[
            # Activations: depend on (e, m, k); ensemble dim squeezed.
            pl.BlockSpec((None, tm, tk), lambda e, m, n, k: (e, m, k)),
            # Weights: block index (e, k, n) changes every grid step (K is
            # innermost), so weights are re-streamed from HBM once per m-tile;
            # a large tm keeps the number of m-tiles small.
            pl.BlockSpec((None, tk, tn), lambda e, m, n, k: (e, k, n)),
            # Bias: tiny (1, tn) tile, indexed by (e, n) only.
            pl.BlockSpec((None, 1, tn), lambda e, m, n, k: (e, 0, n)),
        ],
        out_specs=pl.BlockSpec((None, tm, tn), lambda e, m, n, k: (e, m, n)),
        scratch_shapes=[pltpu.VMEM((tm, tn), jnp.float32)],
    )
    out = pl.pallas_call(
        _tiled_kernel,
        out_shape=jax.ShapeDtypeStruct((E, Bp, Op), out_dtype),
        grid_spec=grid_spec,
        compiler_params=pltpu.CompilerParams(
            dimension_semantics=("parallel", "parallel", "parallel", "arbitrary"),
            vmem_limit_bytes=vmem_limit,
        ),
    )(x_p, w_p, b_p)

    if (Bp, Op) != (B, O):
        out = out[:, :B, :O]
    return out


if __name__ == "__main__":
    key = jax.random.PRNGKey(0)

    # --- Small case (ensemble_size=4, batch=8, in=32, out=16) ---------------
    E, B, I, O = 4, 8, 32, 16
    kx, kw, kb, k2 = jax.random.split(key, 4)
    x = jax.random.normal(kx, (E, B, I), dtype=jnp.float32)
    lin_w = jax.random.normal(kw, (E, I, O), dtype=jnp.float32) * 0.1
    lin_b = jax.random.normal(kb, (E, O), dtype=jnp.float32) * 0.1

    ref = (
        jnp.einsum("ebi,eio->ebo", x, lin_w, precision=jax.lax.Precision.HIGHEST)
        + lin_b[:, None, :]
    )

    out = jax.block_until_ready(ensemble_linear(x, lin_w, lin_b))
    assert out.shape == (E, B, O) and out.dtype == x.dtype
    assert jnp.allclose(out, ref, atol=1e-4, rtol=1e-4)

    # Same tiny shapes forced through the tiled path (exercises alignment
    # padding, the bias-seeded accumulator and the pl.when init/finalize).
    out_t = jax.block_until_ready(ensemble_linear(x, lin_w, lin_b, force_tiled=True))
    assert jnp.allclose(out_t, ref, atol=1e-4, rtol=1e-4)

    # --- Moderate case: auto (per-member) path, forced tiled path, bf16 -----
    E2, B2, I2, O2 = 2, 256, 512, 384
    k2x, k2w, k2b = jax.random.split(k2, 3)
    x2 = jax.random.normal(k2x, (E2, B2, I2), dtype=jnp.float32)
    w2 = jax.random.normal(k2w, (E2, I2, O2), dtype=jnp.float32) * 0.05
    b2 = jax.random.normal(k2b, (E2, O2), dtype=jnp.float32) * 0.05

    ref2 = (
        jnp.einsum("ebi,eio->ebo", x2, w2, precision=jax.lax.Precision.HIGHEST)
        + b2[:, None, :]
    )

    out2 = jax.block_until_ready(ensemble_linear(x2, w2, b2))
    assert out2.shape == (E2, B2, O2)
    assert jnp.allclose(out2, ref2, atol=2e-3, rtol=2e-3)

    out2_t = jax.block_until_ready(ensemble_linear(x2, w2, b2, force_tiled=True))
    assert jnp.allclose(out2_t, ref2, atol=2e-3, rtol=2e-3)

    # bf16 compute path (halved HBM bytes, native bf16 MXU on v6e/v7x).
    out2_bf = jax.block_until_ready(
        ensemble_linear(x2, w2, b2, compute_dtype=jnp.bfloat16)
    )
    assert out2_bf.dtype == x2.dtype
    assert jnp.allclose(out2_bf, ref2, atol=5e-2, rtol=5e-2)

    print("KERNEL_OK")
</pallas_src>

<mosaic_0001>
module attributes {stable_mosaic.version = 11 : i64} {
  func.func @_small_kernel(%arg0: i32, %arg1: memref<1x8x32xf32, #tpu.memory_space<vmem>>, %arg2: memref<1x32x16xf32, #tpu.memory_space<vmem>>, %arg3: memref<1x1x16xf32, #tpu.memory_space<vmem>>, %arg4: memref<1x8x16xf32, #tpu.memory_space<vmem>>) attributes {dimension_semantics = [#tpu.dimension_semantics<parallel>], iteration_bounds = array<i64: 4>, scalar_prefetch = 0 : i64, scratch_operands = 0 : i64, tpu.core_type = #tpu.core_type<tc>, window_params = [{transform_indices = @transform_0, window_bounds = array<i64: 1, 8, 32>}, {transform_indices = @transform_1, window_bounds = array<i64: 1, 32, 16>}, {transform_indices = @transform_2, window_bounds = array<i64: 1, 1, 16>}, {transform_indices = @transform_3, window_bounds = array<i64: 1, 8, 16>}]} {
    %c0 = arith.constant 0 : index
    %c0_0 = arith.constant 0 : index
    %c0_1 = arith.constant 0 : index
    %0 = vector.load %arg1[%c0, %c0_0, %c0_1] : memref<1x8x32xf32, #tpu.memory_space<vmem>>, vector<1x8x32xf32>
    %1 = vector.shape_cast %0 : vector<1x8x32xf32> to vector<8x32xf32>
    %c0_2 = arith.constant 0 : index
    %c0_3 = arith.constant 0 : index
    %c0_4 = arith.constant 0 : index
    %2 = vector.load %arg2[%c0_2, %c0_3, %c0_4] : memref<1x32x16xf32, #tpu.memory_space<vmem>>, vector<1x32x16xf32>
    %3 = vector.shape_cast %2 : vector<1x32x16xf32> to vector<32x16xf32>
    %cst = arith.constant dense<0.000000e+00> : vector<8x16xf32>
    %4 = tpu.matmul %1, %3, %cst {dimension_numbers = #tpu.dot_dimension_numbers<[1], [0], [0], [1], [0, 0, 1, 1], [], []>} : vector<8x32xf32>, vector<32x16xf32>, vector<8x16xf32> -> vector<8x16xf32>
    %c0_5 = arith.constant 0 : index
    %c0_6 = arith.constant 0 : index
    %c0_7 = arith.constant 0 : index
    %5 = vector.load %arg3[%c0_5, %c0_6, %c0_7] : memref<1x1x16xf32, #tpu.memory_space<vmem>>, vector<1x1x16xf32>
    %6 = vector.shape_cast %5 : vector<1x1x16xf32> to vector<1x16xf32>
    %7 = vector.broadcast %6 : vector<1x16xf32> to vector<8x16xf32>
    %8 = arith.addf %4, %7 : vector<8x16xf32>
    %c0_8 = arith.constant 0 : index
    %c0_9 = arith.constant 0 : index
    %c0_10 = arith.constant 0 : index
    %9 = vector.load %arg4[%c0_8, %c0_9, %c0_10] : memref<1x8x16xf32, #tpu.memory_space<vmem>>, vector<1x8x16xf32>
    %10 = vector.shape_cast %9 : vector<1x8x16xf32> to vector<8x16xf32>
    %11 = vector.shape_cast %8 : vector<8x16xf32> to vector<1x8x16xf32>
    tpu.vector_store %arg4[%c0_8, %c0_9, %c0_10], %11 {strides = array<i32>} : memref<1x8x16xf32, #tpu.memory_space<vmem>>, vector<1x8x16xf32>,
    return
  }
  func.func @transform_0(%arg0: i32) -> (i32, i32, i32) {
    %c0_i32 = arith.constant 0 : i32
    %c0_i32_0 = arith.constant 0 : i32
    %c0_i32_1 = arith.constant 0 : i32
    return %arg0, %c0_i32, %c0_i32_0 : i32, i32, i32
  }
  func.func @transform_1(%arg0: i32) -> (i32, i32, i32) {
    %c0_i32 = arith.constant 0 : i32
    %c0_i32_0 = arith.constant 0 : i32
    %c0_i32_1 = arith.constant 0 : i32
    return %arg0, %c0_i32, %c0_i32_0 : i32, i32, i32
  }
  func.func @transform_2(%arg0: i32) -> (i32, i32, i32) {
    %c0_i32 = arith.constant 0 : i32
    %c0_i32_0 = arith.constant 0 : i32
    %c0_i32_1 = arith.constant 0 : i32
    return %arg0, %c0_i32, %c0_i32_0 : i32, i32, i32
  }
  func.func @transform_3(%arg0: i32) -> (i32, i32, i32) {
    %c0_i32 = arith.constant 0 : i32
    %c0_i32_0 = arith.constant 0 : i32
    %c0_i32_1 = arith.constant 0 : i32
    return %arg0, %c0_i32, %c0_i32_0 : i32, i32, i32
  }
}

</mosaic_0001>

<llo_original>
// kernel: tpu_custom_call.1
$region0: #{tpu_custom_call.1}
  #allocation0 [shape = 'u32[]', space=smem, size = 0x4, offset = 0x4, fixed_abs, tag = 'smem constant byte address 0x4 - core index']
  #allocation1 [shape = 'u32[144,128]{1,0:T(1,128)}', space=vmem, size = 0x12000, scoped, tag = 'internal scratch']
  %s0 = inlined_call_operand.vmem [shape: f32[4,8,32], index: 0, kind: input, shape index: {}]
  %s1 = inlined_call_operand.vmem [shape: f32[4,32,16], index: 1, kind: input, shape index: {}]
  %s2 = inlined_call_operand.vmem [shape: f32[4,1,16], index: 2, kind: input, shape index: {}]
  %s3 = inlined_call_operand.hbm [shape: f32[4,8,16], index: 3, kind: output, shape index: {}]
  %s4 = sld [smem:[#allocation0]]
  $region45: #{tpu_custom_call.1} parent=0
    _
  %s6 = ssub.s32 1, %s4
  %s7 = scalar_select 0, %s6, %s4
  $region1: #{tpu_custom_call.1} parent=0
    #allocation2 [shape = 'u8[8192]{0}', space=vmem, size = 0x2000, scoped, tag = 'output window, operand 0']
    #allocation3 [shape = 's32[2]{0}', space=sflag, size = 0x8, scoped, tag = 'scoped memory for tpu_custom_call.1']
    %8 = vsyncpa [#allocation3], 0
    %s9 = scalar_lea.sflag [#allocation3], 1
    %10 = vsyncpa %s9, 0
    loop: start=0, step=1, limit=6
    $region2: #{tpu_custom_call.1} parent=1 // loop_pre_header
      _
    $region3: #{tpu_custom_call.1} parent=1 // loop_header
      %s12 = sphi 0, %s16
      %p13 = scmp.ge.s32.totalorder %s12, 6
      %s22 = sphi 0, %s24
      %s25 = sphi 0, %s22
      %s26 = sphi 0, %s25
      %s42 = sphi 0, %s26
      %s48 = sphi 0, %s50
      %s51 = sphi 0, %s48
      %s52 = sphi 0, %s51
      %s68 = sphi 0, %s52
      %s74 = sphi 0, %s76
      %s77 = sphi 0, %s74
      %s78 = sphi 0, %s77
      %s94 = sphi 0, %s78
      %s100 = sphi 0, %s102
      %s103 = sphi 0, %s100
      %s104 = sphi 0, %s103
      %s120 = sphi 0, %s104
    $region4: #{tpu_custom_call.1} parent=1 // loop_header_branch
      %15 = sbr.rel (%p13) target = $region8
    $region5: #{tpu_custom_call.1} parent=1 // loop_body
      %s17 = ssub.s32 %s12, 1
      %s18 = ssub.s32 %s12, 2
      %s19 = sadd.s32 %s12, 1
      %s20 = ssub.s32 %s12, %s19
      %p21 = scmp.eq.s32.totalorder %s20, 0
      %s23 = sadd.s32 %s22, 1
      %s24 = scalar_select %p21, %s22, %s23
      %p27 = pneg %p21
      %p28 = scmp.eq.s32.totalorder %s12, 3
      %p29 = por %p27, %p28
      %p30 = scmp.ne.s32.totalorder %s22, %s25
      %p31 = scmp.eq.s32.totalorder %s12, 0
      %p32 = por %p30, %p31
      %p33 = scmp.ne.s32.totalorder %s22, %s25
      %p34 = scmp.eq.s32.totalorder %s17, 3
      %p35 = por %p33, %p34
      %p36 = scmp.ne.s32.totalorder %s25, %s26
      %p37 = scmp.eq.s32.totalorder %s17, 0
      %p38 = por %p36, %p37
      %p39 = scmp.ne.s32.totalorder %s25, %s26
      %p40 = scmp.eq.s32.totalorder %s18, 3
      %p41 = por %p39, %p40
      %p43 = scmp.ne.s32.totalorder %s26, %s42
      %p44 = scmp.eq.s32.totalorder %s18, 0
      %p45 = por %p43, %p44
      %s46 = ssub.s32 %s12, %s19
      %p47 = scmp.eq.s32.totalorder %s46, 0
      %s49 = sadd.s32 %s48, 1
      %s50 = scalar_select %p47, %s48, %s49
      %p53 = pneg %p47
      %p54 = scmp.eq.s32.totalorder %s12, 3
      %p55 = por %p53, %p54
      %p56 = scmp.ne.s32.totalorder %s48, %s51
      %p57 = scmp.eq.s32.totalorder %s12, 0
      %p58 = por %p56, %p57
      %p59 = scmp.ne.s32.totalorder %s48, %s51
      %p60 = scmp.eq.s32.totalorder %s17, 3
      %p61 = por %p59, %p60
      %p62 = scmp.ne.s32.totalorder %s51, %s52
      %p63 = scmp.eq.s32.totalorder %s17, 0
      %p64 = por %p62, %p63
      %p65 = scmp.ne.s32.totalorder %s51, %s52
      %p66 = scmp.eq.s32.totalorder %s18, 3
      %p67 = por %p65, %p66
      %p69 = scmp.ne.s32.totalorder %s52, %s68
      %p70 = scmp.eq.s32.totalorder %s18, 0
      %p71 = por %p69, %p70
      %s72 = ssub.s32 %s12, %s19
      %p73 = scmp.eq.s32.totalorder %s72, 0
      %s75 = sadd.s32 %s74, 1
      %s76 = scalar_select %p73, %s74, %s75
      %p79 = pneg %p73
      %p80 = scmp.eq.s32.totalorder %s12, 3
      %p81 = por %p79, %p80
      %p82 = scmp.ne.s32.totalorder %s74, %s77
      %p83 = scmp.eq.s32.totalorder %s12, 0
      %p84 = por %p82, %p83
      %p85 = scmp.ne.s32.totalorder %s74, %s77
      %p86 = scmp.eq.s32.totalorder %s17, 3
      %p87 = por %p85, %p86
      %p88 = scmp.ne.s32.totalorder %s77, %s78
      %p89 = scmp.eq.s32.totalorder %s17, 0
      %p90 = por %p88, %p89
      %p91 = scmp.ne.s32.totalorder %s77, %s78
      %p92 = scmp.eq.s32.totalorder %s18, 3
      %p93 = por %p91, %p92
      %p95 = scmp.ne.s32.totalorder %s78, %s94
      %p96 = scmp.eq.s32.totalorder %s18, 0
      %p97 = por %p95, %p96
      %s98 = ssub.s32 %s12, %s19
      %p99 = scmp.eq.s32.totalorder %s98, 0
      %s101 = sadd.s32 %s100, 1
      %s102 = scalar_select %p99, %s100, %s101
      %p105 = pneg %p99
      %p106 = scmp.eq.s32.totalorder %s12, 3
      %p107 = por %p105, %p106
      %p108 = scmp.ne.s32.totalorder %s100, %s103
      %p109 = scmp.eq.s32.totalorder %s12, 0
      %p110 = por %p108, %p109
      %p111 = scmp.ne.s32.totalorder %s100, %s103
      %p112 = scmp.eq.s32.totalorder %s17, 3
      %p113 = por %p111, %p112
      %p114 = scmp.ne.s32.totalorder %s103, %s104
      %p115 = scmp.eq.s32.totalorder %s17, 0
      %p116 = por %p114, %p115
      %p117 = scmp.ne.s32.totalorder %s103, %s104
      %p118 = scmp.eq.s32.totalorder %s18, 3
      %p119 = por %p117, %p118
      %p121 = scmp.ne.s32.totalorder %s104, %s120
      %p122 = scmp.eq.s32.totalorder %s18, 0
      %p123 = por %p121, %p122
      %p124 = scmp.le.s32.totalorder 1, %s12
      %p125 = scmp.lt.s32.totalorder %s12, 5
      %p126 = pnand %p124, %p125
      %p127 = pneg %p126
      // Predicated region
      $region9: #{tpu_custom_call.1} parent=5 // pred_check
        _
      $region10: #{tpu_custom_call.1} parent=5 // pred_check_branch
        %129 = sbr.rel (%p126) target = $region12
      $region11: #{tpu_custom_call.1} parent=5 // pred_region
        %s130 = ssub.s32 %s12, 1
      $region12: #{tpu_custom_call.1} parent=5 // pred_fallthru
        _
      %p131 = scmp.lt.s32.totalorder %s12, 4
      // Predicated region
      $region13: #{tpu_custom_call.1} parent=5 // pred_check
        %p132 = pneg %p131
      $region14: #{tpu_custom_call.1} parent=5 // pred_check_branch
        %134 = sbr.rel (%p132) target = $region16
      $region15: #{tpu_custom_call.1} parent=5 // pred_region
        // Predicated region
        $region17: #{tpu_custom_call.1} parent=15 // pred_check
          %p135 = pneg %p32
        $region18: #{tpu_custom_call.1} parent=15 // pred_check_branch
          %137 = sbr.rel (%p135) target = $region20
        $region19: #{tpu_custom_call.1} parent=15 // pred_region
          %p138 = scmp.lt.s32.totalorder %s12, 3
          %s139 = scalar_select %p138, %s12, 3
          %s140 = smul.addr %s139, 8
          %s141 = scalar_lea.vmem %s0, %s140
        $region20: #{tpu_custom_call.1} parent=15 // pred_fallthru
          _
        // Predicated region
        $region21: #{tpu_custom_call.1} parent=15 // pred_check
          %p142 = pneg %p58
        $region22: #{tpu_custom_call.1} parent=15 // pred_check_branch
          %144 = sbr.rel (%p142) target = $region24
        $region23: #{tpu_custom_call.1} parent=15 // pred_region
          %p145 = scmp.lt.s32.totalorder %s12, 3
          %s146 = scalar_select %p145, %s12, 3
          %s147 = smul.addr %s146, 4
          %s148 = smul.addr %s147, 8
          %s149 = scalar_lea.vmem %s1, %s148
        $region24: #{tpu_custom_call.1} parent=15 // pred_fallthru
          _
        // Predicated region
        $region25: #{tpu_custom_call.1} parent=15 // pred_check
          %p150 = pneg %p84
        $region26: #{tpu_custom_call.1} parent=15 // pred_check_branch
          %152 = sbr.rel (%p150) target = $region28
        $region27: #{tpu_custom_call.1} parent=15 // pred_region
          %p153 = scmp.lt.s32.totalorder %s12, 3
          %s154 = scalar_select %p153, %s12, 3
          %s155 = scalar_lea.vmem %s2, %s154
        $region28: #{tpu_custom_call.1} parent=15 // pred_fallthru
          _
      $region16: #{tpu_custom_call.1} parent=5 // pred_fallthru
        _
      %p156 = scmp.le.s32.totalorder 1, %s12
      %p157 = scmp.lt.s32.totalorder %s12, 5
      %p158 = pnand %p156, %p157
      %p159 = pneg %p158
      // Predicated region
      $region29: #{tpu_custom_call.1} parent=5 // pred_check
        _
      $region30: #{tpu_custom_call.1} parent=5 // pred_check_branch
        %161 = sbr.rel (%p158) target = $region32
      $region31: #{tpu_custom_call.1} parent=5 // pred_region
        %s162 = ssub.s32 %s12, 1
        %p163 = scmp.lt.s32.totalorder %s17, 3
        %s164 = scalar_select %p163, %s17, 3
        %s165 = smul.addr %s164, 8
        %s166 = scalar_lea.vmem %s0, %s165
        %p167 = pneg %p38
        %p168 = pneg %p35
        %p169 = scmp.lt.s32.totalorder %s17, 3
        %s170 = scalar_select %p169, %s17, 3
        %s171 = smul.addr %s170, 4
        %s172 = smul.addr %s171, 8
        %s173 = scalar_lea.vmem %s1, %s172
        %p174 = pneg %p64
        %p175 = pneg %p61
        %p176 = scmp.lt.s32.totalorder %s17, 3
        %s177 = scalar_select %p176, %s17, 3
        %s178 = scalar_lea.vmem %s2, %s177
        %p179 = pneg %p90
        %p180 = pneg %p87
        %p181 = pneg %p116
        %p182 = pneg %p113
        %s183 = sand.u32 %s103, 1
        %s184 = scalar_lea.sflag [#allocation3], %s183
        %s185 = sand.u32 %s103, 1
        %s186 = smul.addr %s185, 8
        %s187 = scalar_lea.vmem [#allocation2], %s186
        %p188 = scmp.lt.s32.totalorder %s17, 3
        %s189 = scalar_select %p188, %s17, 3
        %s190 = smul.addr %s189, 8
        %s191 = scalar_lea.vmem %s0, %s190
        %p192 = scmp.lt.s32.totalorder %s17, 3
        %s193 = scalar_select %p192, %s17, 3
        %s194 = smul.addr %s193, 4
        %s195 = smul.addr %s194, 8
        %s196 = scalar_lea.vmem %s1, %s195
        %p197 = scmp.lt.s32.totalorder %s17, 3
        %s198 = scalar_select %p197, %s17, 3
        %s199 = scalar_lea.vmem %s2, %s198
        %v200 = vld [vmem:[%s191] sm:$0xff]
        %v201 = vld [vmem:[%s196] sm:$0xff]
        %v202 = vld [vmem:[%s196 + $0x8] sm:$0xff]
        %v203 = vld [vmem:[%s196 + $0x10] sm:$0xff]
        %v204 = vld [vmem:[%s196 + $0x18] sm:$0xff]
        %v205 = vld [vmem:[%s199] sm:$0x1]
        %v207 = vlaneseq
        %v208 = vshrl.u32 %v207, 7
        %v209 = vsub.s32 0, %v208
        %v210 = vrot.slane %v205, %v209
        %vm212 = vcmask 261120
        %v214 = vsel %vm212, %v200, 0
        %216 = vmatprep.subr.mxu0 0.0
        %217 = vmatpush1.msra.mxu0 %v201
        %218 = vmatprep.subr.mxu0 0.0
        %219 = vmatpush1.msra.mxu0 %v202
        %220 = vmatprep.subr.mxu0 0.0
        %221 = vmatpush1.msra.mxu0 %v203
        %222 = vmatprep.subr.mxu0 0.0
        %223 = vmatpush1.msra.mxu0 %v204
        %224 = vmatprep.subr.mxu0 0.0
        %225 = vmatpush1.msra.mxu0 0.0
        %226 = vmatprep.subr.mxu0 0.0
        %227 = vmatpush1.msra.mxu0 0.0
        %228 = vmatprep.subr.mxu0 0.0
        %229 = vmatpush1.msra.mxu0 0.0
        %230 = vmatprep.subr.mxu0 0.0
        %231 = vmatpush1.msra.mxu0 0.0
        %232 = vmatprep.subr.mxu0 0.0
        %233 = vmatpush1.msra.mxu0 0.0
        %234 = vmatprep.subr.mxu0 0.0
        %235 = vmatpush1.msra.mxu0 0.0
        %236 = vmatprep.subr.mxu0 0.0
        %237 = vmatpush1.msra.mxu0 0.0
        %238 = vmatprep.subr.mxu0 0.0
        %239 = vmatpush1.msra.mxu0 0.0
        %240 = vmatprep.subr.mxu0 0.0
        %241 = vmatpush1.msra.mxu0 0.0
        %242 = vmatprep.subr.mxu0 0.0
        %243 = vmatpush1.msra.mxu0 0.0
        %244 = vmatprep.subr.mxu0 0.0
        %245 = vmatpush1.msra.mxu0 0.0
        %246 = vmatprep.subr.mxu0 0.0
        %247 = vmatpush1.msra.mxu0 0.0
        %248 = vmatprep.subr.mxu0 0.0
        %249 = vmatpush1.msra.mxu0 0.0
        %250 = vmatprep.subr.mxu0 0.0
        %251 = vmatpush1.msra.mxu0 0.0
        %252 = vmatprep.subr.mxu0 0.0
        %253 = vmatpush1.msra.mxu0 0.0
        %254 = vmatprep.subr.mxu0 0.0
        %255 = vmatpush1.msra.mxu0 0.0
        %256 = vmatprep.subr.mxu0 0.0
        %257 = vmatpush1.msra.mxu0 0.0
        %258 = vmatprep.subr.mxu0 0.0
        %259 = vmatpush1.msra.mxu0 0.0
        %260 = vmatprep.subr.mxu0 0.0
        %261 = vmatpush1.msra.mxu0 0.0
        %262 = vmatprep.subr.mxu0 0.0
        %263 = vmatpush1.msra.mxu0 0.0
        %264 = vmatprep.subr.mxu0 0.0
        %265 = vmatpush1.msra.mxu0 0.0
        %266 = vmatprep.subr.mxu0 0.0
        %267 = vmatpush1.msra.mxu0 0.0
        %268 = vmatprep.subr.mxu0 0.0
        %269 = vmatpush1.msra.mxu0 0.0
        %270 = vmatprep.subr.mxu0 0.0
        %271 = vmatpush1.msra.mxu0 0.0
        %272 = vmatprep.subr.mxu0 0.0
        %273 = vmatpush1.msra.mxu0 0.0
        %274 = vmatprep.subr.mxu0 0.0
        %275 = vmatpush1.msra.mxu0 0.0
        %276 = vmatprep.subr.mxu0 0.0
        %277 = vmatpush1.msra.mxu0 0.0
        %278 = vmatprep.subr.mxu0 0.0
        %279 = vmatpush1.msra.mxu0 0.0
        %280 = vmatprep.mubr.f32.mxu0 0.0
        %281 = vmatmul.mubr.f32.gmra.mrb[0].mxu0 %v214
        %v282 = vpop.f32.mrb[0].mxu0
        %v283 = vadd.f32 %v210, %v282
        %v284 = vpop.f32.mrb[0].mxu0
        %285 = vdwg.mxu0
        %vm286 = vcmask 130048
        %287 = vst.msk [vmem:[%s187] sm:$0xff] %vm286, %v283
        %s288 = sand.u32 %s103, 1
        %s289 = scalar_lea.sflag [#allocation3], %s288
        %s290 = sand.u32 %s103, 1
        %s291 = smul.addr %s290, 8
        %s292 = scalar_lea.vmem [#allocation2], %s291
        // Predicated region
        $region33: #{tpu_custom_call.1} parent=31 // pred_check
          %p293 = pneg %p113
        $region34: #{tpu_custom_call.1} parent=31 // pred_check_branch
          %295 = sbr.rel (%p293) target = $region36
        $region35: #{tpu_custom_call.1} parent=31 // pred_region
          %s297 = ssub.s32 128, 128
          %298 = vsyncadd %s289, %s297
          %s299 = smul.addr %s17, 128
          %s300 = scalar_lea.hbm %s3, %s299
          %s302 = sshll.u32 %s292, 4
          %s303 = int_to_ptr.vmem [resolvable:$true] %s302
          %305 = dma.vmem_to_hbm [thread:$0]  %s303, 128, %s300, %s289
        $region36: #{tpu_custom_call.1} parent=31 // pred_fallthru
          _
      $region32: #{tpu_custom_call.1} parent=5 // pred_fallthru
        _
      %p306 = scmp.le.s32.totalorder 2, %s12
      // Predicated region
      $region37: #{tpu_custom_call.1} parent=5 // pred_check
        %p307 = pneg %p306
      $region38: #{tpu_custom_call.1} parent=5 // pred_check_branch
        %309 = sbr.rel (%p307) target = $region40
      $region39: #{tpu_custom_call.1} parent=5 // pred_region
        %s310 = ssub.s32 %s12, 2
        // Predicated region
        $region41: #{tpu_custom_call.1} parent=39 // pred_check
          %p311 = pneg %p119
        $region42: #{tpu_custom_call.1} parent=39 // pred_check_branch
          %313 = sbr.rel (%p311) target = $region44
        $region43: #{tpu_custom_call.1} parent=39 // pred_region
          %s314 = sand.u32 %s104, 1
          %s315 = scalar_lea.sflag [#allocation3], %s314
          %s316 = sand.u32 %s104, 1
          %s317 = smul.addr %s316, 8
          %s318 = scalar_lea.vmem [#allocation2], %s317
          %319 = dma.done %s315, 128
        $region44: #{tpu_custom_call.1} parent=39 // pred_fallthru
          _
      $region40: #{tpu_custom_call.1} parent=5 // pred_fallthru
        _
    $region6: #{tpu_custom_call.1} parent=1 // loop_footer
      %s16 = sadd.s32 1, %s12
    $region7: #{tpu_custom_call.1} parent=1 // loop_footer_branch
      %11 = sbr.rel target = $region3
    $region8: #{tpu_custom_call.1} parent=1 // loop_exit
      _
    %320 = vsyncpa [#allocation3], 1
    %s321 = scalar_lea.sflag [#allocation3], 1
    %322 = vsyncpa %s321, 1

</llo_original>
